<compile_context>
chip_gen: v6e
topology: v6e:2x2x1
jax: 0.10.0
libtpu: 0.0.40
codegen_flags: <defaults>
</compile_context>

<pallas_src>
import jax
import jax.numpy as jnp
from jax.experimental import pallas as pl
from jax.experimental.pallas import tpu as pltpu


def _round_up(x, m):
    return ((x + m - 1) // m) * m


def gating_kernel(x_ref, mu_ref, o_ref):
    # x_ref / o_ref: (tile_b, tile_d) activation tile.
    # mu_ref: (8, tile_d) f32 slab whose rows are identical copies of mu.
    # Multiply in f32 (free: kernel is DMA-bound, VPU has slack), cast on store.
    mu_row = mu_ref[0:1, :]                                   # (1, tile_d) f32
    o_ref[...] = (x_ref[...].astype(jnp.float32) * mu_row).astype(o_ref.dtype)


def gating_forward(x, mu, *, tile_bytes=8 * 1024 * 1024,
                   min_pallas_bytes=256 * 1024, vmem_limit_bytes=None):
    """Pallas implementation of GatingLayer.forward: new_x = prev_x * mu.

    x : (B, D) activations, feature dim last (lane axis).
    mu: (D,) learned gate parameter, broadcast over the batch.
    """
    B, D = x.shape
    dtype = x.dtype
    itemsize = jnp.dtype(dtype).itemsize
    total_bytes = B * D * itemsize

    mu_f32 = mu.astype(jnp.float32)

    # ---- small-input fallback: launch + pipeline overhead dominates tiny
    #      shapes; XLA's fused elementwise multiply is strictly faster there.
    if total_bytes < min_pallas_bytes:
        return (x.astype(jnp.float32) * mu_f32).astype(dtype)

    sub = max(8, 32 // itemsize)   # sublane rows per vreg: f32 -> 8, bf16 -> 16, int8 -> 32
    LANE = 128

    # ---- feature (lane) tiling: lane-dense (multiple of 128), no exact-divisor
    #      requirement — one masked edge block in D is fine. Cap keeps a single
    #      tile row at <= 32 KiB so the batch dim can still be tiled.
    tile_d = min(_round_up(D, LANE), 8192)
    grid_d = pl.cdiv(D, tile_d)

    # ---- batch (sublane) tiling: biggest tile within the per-buffer budget.
    tile_b = max(sub, (tile_bytes // (tile_d * itemsize)) // sub * sub)
    tile_b = min(tile_b, _round_up(B, sub))

    # Ensure enough grid steps that both v7x TensorCores (and the DMA pipeline)
    # get work; keep halving tile_b (down to one vreg of rows) until we do.
    min_steps = 2 if total_bytes <= (2 << 20) else 4
    while tile_b > sub and pl.cdiv(B, tile_b) * grid_d < min_steps:
        new_tile_b = max(sub, _round_up(tile_b // 2, sub))
        if new_tile_b == tile_b:
            break
        tile_b = new_tile_b

    grid_b = pl.cdiv(B, tile_b)

    # mu pre-broadcast to a full vreg-aligned (8, D) f32 slab. With the grid
    # ordered (feature, batch) its block index (0, j) is constant across the
    # inner batch sweep, so it is only DMA'd when the feature block changes.
    mu_slab = jnp.broadcast_to(mu_f32.reshape(1, D), (8, D))

    if vmem_limit_bytes is None:
        per_tile = tile_b * tile_d * itemsize
        mu_tile = 8 * tile_d * 4
        # double-buffered x tile + out tile + mu tile (already counts buffering)
        needed = 2 * (2 * per_tile) + 2 * mu_tile
        # 25% headroom; floor 32 MiB (v5e's scoped default is only 16 MiB),
        # cap 48 MiB (v7x physical VMEM is 64 MiB per TensorCore).
        vmem_limit_bytes = int(min(max(int(needed * 1.25), 32 << 20), 48 << 20))

    out = pl.pallas_call(
        gating_kernel,
        out_shape=jax.ShapeDtypeStruct((B, D), dtype),
        grid=(grid_d, grid_b),            # feature slow, batch fast -> mu stays resident
        in_specs=[
            pl.BlockSpec((tile_b, tile_d), lambda j, i: (i, j)),
            pl.BlockSpec((8, tile_d), lambda j, i: (0, j)),
        ],
        out_specs=pl.BlockSpec((tile_b, tile_d), lambda j, i: (i, j)),
        compiler_params=pltpu.CompilerParams(
            dimension_semantics=("parallel", "parallel"),
            vmem_limit_bytes=vmem_limit_bytes,
        ),
    )(x, mu_slab)

    return out


def gating_regularizer(mu):
    # regularizer(x) = sum(|x|); trivial scalar reduction, done in plain JAX.
    return jnp.sum(jnp.abs(mu))


if __name__ == "__main__":
    key = jax.random.PRNGKey(0)
    k_x, k_mu, k_x2, k_x3, k_x4 = jax.random.split(key, 5)

    # Case 1: small, (8, 128)-aligned shapes, forced through the Pallas kernel.
    B, D = 8, 128
    x = jax.random.normal(k_x, (B, D), dtype=jnp.float32)
    # Deterministic parameter init matching torch: mu = 0.01 * randn(input_dim)
    mu = 0.01 * jax.random.normal(k_mu, (D,), dtype=jnp.float32)
    out = jax.block_until_ready(gating_forward(x, mu, min_pallas_bytes=0))
    assert jnp.allclose(out, x * mu, atol=1e-6, rtol=1e-6), "case 1 mismatch"

    # Case 2: tiny input -> plain-JAX fallback path.
    B2, D2 = 12, 384
    x2 = jax.random.normal(k_x2, (B2, D2), dtype=jnp.float32)
    mu2 = 0.01 * jax.random.normal(k_mu, (D2,), dtype=jnp.float32)
    out2 = jax.block_until_ready(gating_forward(x2, mu2))
    assert out2.shape == (B2, D2)
    assert jnp.allclose(out2, x2 * mu2, atol=1e-6, rtol=1e-6), "case 2 mismatch"

    # Case 3: larger, non-aligned shapes -> Pallas path with ragged edge blocks
    # in both batch (300 % 8 != 0) and feature (600 % 128 != 0) dims.
    B3, D3 = 300, 600
    x3 = jax.random.normal(k_x3, (B3, D3), dtype=jnp.float32)
    mu3 = 0.01 * jax.random.normal(k_mu, (D3,), dtype=jnp.float32)
    out3 = jax.block_until_ready(gating_forward(x3, mu3))
    assert out3.shape == (B3, D3)
    assert jnp.allclose(out3, x3 * mu3, atol=1e-6, rtol=1e-6), "case 3 mismatch"

    # Case 4: bf16 activations -> multiply performed in f32, cast on store.
    B4, D4 = 64, 600
    x4 = jax.random.normal(k_x4, (B4, D4), dtype=jnp.bfloat16)
    mu4 = 0.01 * jax.random.normal(k_mu, (D4,), dtype=jnp.float32)
    out4 = jax.block_until_ready(gating_forward(x4, mu4, min_pallas_bytes=0))
    ref4 = (x4.astype(jnp.float32) * mu4).astype(jnp.bfloat16)
    assert out4.dtype == jnp.bfloat16 and out4.shape == (B4, D4)
    assert jnp.allclose(out4.astype(jnp.float32), ref4.astype(jnp.float32),
                        atol=1e-2, rtol=1e-2), "case 4 mismatch"

    # Exercise the regularizer as well (plain JAX scalar reduction).
    _ = jax.block_until_ready(gating_regularizer(mu))

    print("KERNEL_OK")
</pallas_src>

<mosaic_0001>
module attributes {stable_mosaic.version = 11 : i64} {
  func.func @gating_kernel(%arg0: i32, %arg1: i32, %arg2: memref<8x128xf32, #tpu.memory_space<vmem>>, %arg3: memref<8x128xf32, #tpu.memory_space<vmem>>, %arg4: memref<8x128xf32, #tpu.memory_space<vmem>>) attributes {dimension_semantics = [#tpu.dimension_semantics<parallel>, #tpu.dimension_semantics<parallel>], iteration_bounds = array<i64: 1, 1>, scalar_prefetch = 0 : i64, scratch_operands = 0 : i64, tpu.core_type = #tpu.core_type<tc>, window_params = [{transform_indices = @transform_0, window_bounds = array<i64: 8, 128>}, {transform_indices = @transform_1, window_bounds = array<i64: 8, 128>}, {transform_indices = @transform_2, window_bounds = array<i64: 8, 128>}]} {
    %c0 = arith.constant 0 : index
    %c0_0 = arith.constant 0 : index
    %0 = vector.load %arg3[%c0, %c0_0] : memref<8x128xf32, #tpu.memory_space<vmem>>, vector<1x128xf32>
    %c0_1 = arith.constant 0 : index
    %c0_2 = arith.constant 0 : index
    %1 = vector.load %arg2[%c0_1, %c0_2] : memref<8x128xf32, #tpu.memory_space<vmem>>, vector<8x128xf32>
    %2 = vector.broadcast %0 : vector<1x128xf32> to vector<8x128xf32>
    %3 = arith.mulf %1, %2 : vector<8x128xf32>
    %c0_3 = arith.constant 0 : index
    %c0_4 = arith.constant 0 : index
    %4 = vector.load %arg4[%c0_3, %c0_4] : memref<8x128xf32, #tpu.memory_space<vmem>>, vector<8x128xf32>
    tpu.vector_store %arg4[%c0_3, %c0_4], %3 {strides = array<i32>} : memref<8x128xf32, #tpu.memory_space<vmem>>, vector<8x128xf32>,
    return
  }
  func.func @transform_0(%arg0: i32, %arg1: i32) -> (i32, i32) {
    %c0_i32 = arith.constant 0 : i32
    return %arg1, %arg0 : i32, i32
  }
  func.func @transform_1(%arg0: i32, %arg1: i32) -> (i32, i32) {
    %c0_i32 = arith.constant 0 : i32
    %c0_i32_0 = arith.constant 0 : i32
    return %c0_i32, %arg0 : i32, i32
  }
  func.func @transform_2(%arg0: i32, %arg1: i32) -> (i32, i32) {
    %c0_i32 = arith.constant 0 : i32
    return %arg1, %arg0 : i32, i32
  }
}

</mosaic_0001>

<llo_original>
// kernel: tpu_custom_call.1
$region0: #{tpu_custom_call.1}
  #allocation0 [shape = 'u32[]', space=smem, size = 0x4, offset = 0x4, fixed_abs, tag = 'smem constant byte address 0x4 - core index']
  #allocation1 [shape = 'u32[144,128]{1,0:T(1,128)}', space=vmem, size = 0x12000, scoped, tag = 'internal scratch']
  %s0 = inlined_call_operand.hbm [shape: f32[8,128], index: 0, kind: input, shape index: {}]
  %s1 = inlined_call_operand.hbm [shape: f32[8,128], index: 1, kind: input, shape index: {}]
  %s2 = inlined_call_operand.hbm [shape: f32[8,128], index: 2, kind: output, shape index: {}]
  %s3 = sld [smem:[#allocation0]]
  $region26: #{tpu_custom_call.1} parent=0
    _
  %s5 = ssub.s32 1, %s3
  %s6 = scalar_select 0, %s5, %s3
  $region1: #{tpu_custom_call.1} parent=0
    #allocation2 [shape = 'u8[4096]{0}', space=vmem, size = 0x1000, scoped, tag = 'input window, operand 0, single buffered']
    #allocation3 [shape = 's32[1]{0}', space=sflag, size = 0x4, scoped, tag = 'scoped memory for tpu_custom_call.1']
    #allocation4 [shape = 's32[1]{0}', space=sflag, size = 0x4, scoped, tag = 'scoped memory for tpu_custom_call.1']
    #allocation5 [shape = 'u8[4096]{0}', space=vmem, size = 0x1000, scoped, tag = 'input window, operand 1, single buffered']
    #allocation6 [shape = 's32[1]{0}', space=sflag, size = 0x4, scoped, tag = 'scoped memory for tpu_custom_call.1']
    #allocation7 [shape = 'u8[4096]{0}', space=vmem, size = 0x1000, scoped, tag = 'output window, operand 0, single buffered']
    %7 = vsyncpa [#allocation3], 0
    %8 = vsyncpa [#allocation6], 0
    %9 = vsyncpa [#allocation4], 0
    // Predicated region
    $region2: #{tpu_custom_call.1} parent=1 // pred_check
      _
    $region3: #{tpu_custom_call.1} parent=1 // pred_check_branch
      %11 = sbr.rel (0) target = $region5
    $region4: #{tpu_custom_call.1} parent=1 // pred_region
      %s13 = ssub.s32 128, 128
      %14 = vsyncadd [#allocation3], %s13
      %s16 = sshll.u32 [#allocation2], 4
      %s17 = int_to_ptr.vmem [resolvable:$true] %s16
      %19 = dma.hbm_to_vmem [thread:$0]  %s0, 128, %s17, [#allocation3]
    $region5: #{tpu_custom_call.1} parent=1 // pred_fallthru
      _
    // Predicated region
    $region6: #{tpu_custom_call.1} parent=1 // pred_check
      _
    $region7: #{tpu_custom_call.1} parent=1 // pred_check_branch
      %21 = sbr.rel (0) target = $region9
    $region8: #{tpu_custom_call.1} parent=1 // pred_region
      %s23 = ssub.s32 128, 128
      %24 = vsyncadd [#allocation6], %s23
      %s26 = sshll.u32 [#allocation5], 4
      %s27 = int_to_ptr.vmem [resolvable:$true] %s26
      %29 = dma.hbm_to_vmem [thread:$0]  %s1, 128, %s27, [#allocation6]
    $region9: #{tpu_custom_call.1} parent=1 // pred_fallthru
      _
    // Predicated region
    $region10: #{tpu_custom_call.1} parent=1 // pred_check
      _
    $region11: #{tpu_custom_call.1} parent=1 // pred_check_branch
      %31 = sbr.rel (0) target = $region13
    $region12: #{tpu_custom_call.1} parent=1 // pred_region
      %32 = dma.done [#allocation3], 128
    $region13: #{tpu_custom_call.1} parent=1 // pred_fallthru
      _
    // Predicated region
    $region14: #{tpu_custom_call.1} parent=1 // pred_check
      _
    $region15: #{tpu_custom_call.1} parent=1 // pred_check_branch
      %34 = sbr.rel (0) target = $region17
    $region16: #{tpu_custom_call.1} parent=1 // pred_region
      %35 = dma.done [#allocation6], 128
    $region17: #{tpu_custom_call.1} parent=1 // pred_fallthru
      _
    %v36 = vld [vmem:[#allocation5] sm:$0x1]
    %v37 = vld [vmem:[#allocation2] sm:$0xff]
    %v38 = vlaneseq
    %v39 = vshrl.u32 %v38, 7
    %v40 = vsub.s32 0, %v39
    %v41 = vrot.slane %v36, %v40
    %v42 = vmul.f32 %v37, %v41
    %43 = vst [vmem:[#allocation7] sm:$0xff] %v42
    // Predicated region
    $region18: #{tpu_custom_call.1} parent=1 // pred_check
      _
    $region19: #{tpu_custom_call.1} parent=1 // pred_check_branch
      %45 = sbr.rel (0) target = $region21
    $region20: #{tpu_custom_call.1} parent=1 // pred_region
      %s47 = ssub.s32 128, 128
      %48 = vsyncadd [#allocation4], %s47
      %s50 = sshll.u32 [#allocation7], 4
      %s51 = int_to_ptr.vmem [resolvable:$true] %s50
      %53 = dma.vmem_to_hbm [thread:$0]  %s51, 128, %s2, [#allocation4]
    $region21: #{tpu_custom_call.1} parent=1 // pred_fallthru
      _
    // Predicated region
    $region22: #{tpu_custom_call.1} parent=1 // pred_check
      _
    $region23: #{tpu_custom_call.1} parent=1 // pred_check_branch
      %55 = sbr.rel (0) target = $region25
    $region24: #{tpu_custom_call.1} parent=1 // pred_region
      %56 = dma.done [#allocation4], 128
    $region25: #{tpu_custom_call.1} parent=1 // pred_fallthru
      _
    %57 = vsyncpa [#allocation3], 1
    %58 = vsyncpa [#allocation6], 1
    %59 = vsyncpa [#allocation4], 1

</llo_original>
